<compile_context>
chip_gen: v5e
topology: v5e:2x2
jax: 0.10.0
libtpu: 0.0.40
codegen_flags: <defaults>
</compile_context>

<pallas_src>
import functools

import jax
import jax.numpy as jnp
from jax.experimental import pallas as pl
from jax.experimental.pallas import tpu as pltpu


def _sigmoid(x):
    # Explicit formula (EUP exp) — avoids relying on lax.logistic lowering.
    return 1.0 / (1.0 + jnp.exp(-x))


def _excite(pooled, w1t, w2):
    """Excitation MLP for one batch element. All f32, VPU/XLU only (no MXU).

    pooled : (C1, 1) f32 per-channel mean
    w1t    : (C1, c_) f32  == Conv2d(c1, c_, 1, bias=False).weight.T
    w2     : (C1, c_) f32  == Conv2d(c_, c1, 1, bias=False).weight
    returns (C1, 1) f32 sigmoid gate
    """
    h = jnp.sum(w1t * pooled, axis=0, keepdims=True)          # (1, c_)
    h = h * _sigmoid(h)                                        # SiLU
    return _sigmoid(jnp.sum(w2 * h, axis=1, keepdims=True))    # (C1, 1)


# ---------------------------------------------------------------------------
# Fused single-pass kernel: pool + MLP + sigmoid + rescale in one HBM pass.
# ---------------------------------------------------------------------------
def _fused_kernel(x_ref, w1t_ref, w2_ref, o_ref, *, hw):
    """x_ref/o_ref: (1, C1, HW) slab for one batch element; weights: (C1, c_)."""
    x = x_ref[0]                                               # (C1, HW)
    pooled = (jnp.sum(x.astype(jnp.float32), axis=1, keepdims=True)
              * jnp.float32(1.0 / hw))                         # (C1, 1) f32
    s = _excite(pooled, w1t_ref[...], w2_ref[...])             # (C1, 1) f32
    o_ref[0] = (x * s.astype(x.dtype)).astype(o_ref.dtype)


# ---------------------------------------------------------------------------
# Fallback kernel 1: tiled global-average-pool with the excitation MLP fused
# into the finalize step. Output (B, C1, 1) holds the sigmoid gate s.
# ---------------------------------------------------------------------------
def _pool_mlp_kernel(x_ref, w1t_ref, w2_ref, s_ref, *, hw, tile_n):
    j = pl.program_id(1)

    @pl.when(j == 0)
    def _():
        s_ref[...] = jnp.zeros_like(s_ref)

    x = x_ref[...].astype(jnp.float32)                         # (1, C1, tile_n)
    if hw % tile_n != 0:  # static: only emit the mask when the tiling is ragged
        lane = jax.lax.broadcasted_iota(jnp.int32, (1, 1, tile_n), 2)
        x = jnp.where(lane < (hw - j * tile_n), x, 0.0)
    s_ref[...] += jnp.sum(x, axis=2, keepdims=True)

    @pl.when(j == pl.num_programs(1) - 1)
    def _():
        pooled = s_ref[0] * jnp.float32(1.0 / hw)              # (C1, 1)
        s_ref[0] = _excite(pooled, w1t_ref[...], w2_ref[...])


# ---------------------------------------------------------------------------
# Fallback kernel 2: pure streaming channel recalibration out = x * s.
# ---------------------------------------------------------------------------
def _scale_kernel(x_ref, s_ref, o_ref):
    x = x_ref[...]                                             # (1, C1, tile_n)
    o_ref[...] = (x * s_ref[...].astype(x.dtype)).astype(o_ref.dtype)


def _round_down(v, m):
    return (v // m) * m


def _round_up(v, m):
    return ((v + m - 1) // m) * m


def se_forward(x_nchw, params, *,
               fused_slab_budget=8 * 1024 * 1024,   # per-batch C1*HW slab bytes
               tile_budget=4 * 1024 * 1024):        # per-buffer bytes (fallback)
    """SE forward. x_nchw: (B, C1, H, W). params: {'w1': (c_,C1), 'w2': (C1,c_)}."""
    B, C1, H, W = x_nchw.shape
    HW = H * W
    dsize = x_nchw.dtype.itemsize
    c_ = params["w1"].shape[0]

    # NCHW-native flat view: channels -> sublanes, spatial -> lanes (free reshape).
    x3 = x_nchw.reshape(B, C1, HW)
    # Both weights shaped (C1, c_) so the in-kernel MLP is broadcast + reduce only.
    w1t = params["w1"].T.astype(jnp.float32)                   # (C1, c_)
    w2 = params["w2"].astype(jnp.float32)                      # (C1, c_)

    # 48 MiB scoped VMEM: within v7x's 64 MiB physical, ample on v5e/v6e (128 MiB).
    vmem_lim = 48 * 1024 * 1024
    slab_bytes = C1 * HW * dsize

    # ------------------ fused single-pass path (common case) ------------------
    # Live VMEM ~ 2*in + 2*out blocks = 4 * slab_bytes; 8 MiB slab -> 32 MiB < 48.
    if slab_bytes <= fused_slab_budget:
        out = pl.pallas_call(
            functools.partial(_fused_kernel, hw=HW),
            out_shape=jax.ShapeDtypeStruct((B, C1, HW), x_nchw.dtype),
            grid_spec=pltpu.PrefetchScalarGridSpec(
                num_scalar_prefetch=0,
                grid=(B,),
                in_specs=[
                    pl.BlockSpec((1, C1, HW), lambda b: (b, 0, 0)),
                    pl.BlockSpec((C1, c_), lambda b: (0, 0)),
                    pl.BlockSpec((C1, c_), lambda b: (0, 0)),
                ],
                out_specs=pl.BlockSpec((1, C1, HW), lambda b: (b, 0, 0)),
            ),
            compiler_params=pltpu.CompilerParams(
                dimension_semantics=("parallel",),
                vmem_limit_bytes=vmem_lim),
        )(x3, w1t, w2)
        return out.reshape(B, C1, H, W)

    # ----------------------- tiled two-kernel fallback ------------------------
    # Lane tile from a VMEM byte budget: one buffer ~ C1 * tile_n * dsize.
    tile_n = _round_down(max(tile_budget // (C1 * dsize), 128), 128)
    tile_n = max(128, min(tile_n, _round_up(HW, 128)))
    n_tiles = pl.cdiv(HW, tile_n)

    # Kernel 1: tiled pool, excitation MLP fused into the finalize -> gate s.
    s = pl.pallas_call(
        functools.partial(_pool_mlp_kernel, hw=HW, tile_n=tile_n),
        out_shape=jax.ShapeDtypeStruct((B, C1, 1), jnp.float32),
        grid_spec=pltpu.PrefetchScalarGridSpec(
            num_scalar_prefetch=0,
            grid=(B, n_tiles),
            in_specs=[
                pl.BlockSpec((1, C1, tile_n), lambda b, j: (b, 0, j)),
                pl.BlockSpec((C1, c_), lambda b, j: (0, 0)),
                pl.BlockSpec((C1, c_), lambda b, j: (0, 0)),
            ],
            out_specs=pl.BlockSpec((1, C1, 1), lambda b, j: (b, 0, 0)),
        ),
        compiler_params=pltpu.CompilerParams(
            dimension_semantics=("parallel", "arbitrary"),
            vmem_limit_bytes=vmem_lim),
    )(x3, w1t, w2)

    # Kernel 2: lane-dense streaming channel re-scaling (HBM-roofline bound).
    out = pl.pallas_call(
        _scale_kernel,
        out_shape=jax.ShapeDtypeStruct((B, C1, HW), x_nchw.dtype),
        grid_spec=pltpu.PrefetchScalarGridSpec(
            num_scalar_prefetch=0,
            grid=(B, n_tiles),
            in_specs=[
                pl.BlockSpec((1, C1, tile_n), lambda b, j: (b, 0, j)),
                pl.BlockSpec((1, C1, 1), lambda b, j: (b, 0, 0)),
            ],
            out_specs=pl.BlockSpec((1, C1, tile_n), lambda b, j: (b, 0, j)),
        ),
        compiler_params=pltpu.CompilerParams(
            dimension_semantics=("parallel", "parallel"),
            vmem_limit_bytes=vmem_lim),
    )(x3, s)

    return out.reshape(B, C1, H, W)


def _ref_forward(x, params):
    """Pure-JAX reference mirroring the PyTorch SE forward."""
    pooled = jnp.mean(x, axis=(2, 3))                  # AdaptiveAvgPool2d(1)
    h = pooled @ params["w1"].T                        # Conv2d(c1, c_, 1, bias=False)
    h = h * jax.nn.sigmoid(h)                          # SiLU
    s = jax.nn.sigmoid(h @ params["w2"].T)             # Conv2d(c_, c1, 1) + Sigmoid
    return x * s[:, :, None, None]


if __name__ == "__main__":
    key = jax.random.PRNGKey(0)
    k1, k2, k3, k4, k5, k6 = jax.random.split(key, 6)

    # ---- Test 1: fused single-pass path. SE(c1=4, reduction=16) -> c_ = 1. ----
    B, C1, H, W = 2, 4, 16, 16
    c_ = max(1, C1 // 16)
    params = {
        "w1": jax.random.normal(k1, (c_, C1), jnp.float32) * 0.5,   # Conv2d(c1, c_, 1) weight
        "w2": jax.random.normal(k2, (C1, c_), jnp.float32) * 0.5,   # Conv2d(c_, c1, 1) weight
    }
    x = jax.random.normal(k3, (B, C1, H, W), jnp.float32)

    fwd = jax.jit(se_forward)
    out = jax.block_until_ready(fwd(x, params))
    ref = _ref_forward(x, params)
    assert out.shape == (B, C1, H, W), out.shape
    err = float(jnp.max(jnp.abs(out - ref)))
    assert jnp.allclose(out, ref, atol=1e-5, rtol=1e-5), err

    # ---- Test 2: force the tiled fallback (pool+MLP kernel, then scale kernel)
    #      with a ragged last spatial tile. SE(c1=8, reduction=4) -> c_ = 2. ----
    B2, C2, H2, W2 = 2, 8, 20, 20
    c2_ = max(1, C2 // 4)
    params2 = {
        "w1": jax.random.normal(k4, (c2_, C2), jnp.float32) * 0.5,
        "w2": jax.random.normal(k5, (C2, c2_), jnp.float32) * 0.5,
    }
    x2 = jax.random.normal(k6, (B2, C2, H2, W2), jnp.float32)

    fwd_fb = jax.jit(functools.partial(se_forward,
                                       fused_slab_budget=0, tile_budget=4096))
    out2 = jax.block_until_ready(fwd_fb(x2, params2))
    ref2 = _ref_forward(x2, params2)
    assert out2.shape == (B2, C2, H2, W2), out2.shape
    err2 = float(jnp.max(jnp.abs(out2 - ref2)))
    assert jnp.allclose(out2, ref2, atol=1e-5, rtol=1e-5), err2

    print("KERNEL_OK")
</pallas_src>

<mosaic_0001>
module attributes {stable_mosaic.version = 11 : i64} {
  func.func @_fused_kernel(%arg0: i32, %arg1: memref<1x4x256xf32, #tpu.memory_space<vmem>>, %arg2: memref<4x1xf32, #tpu.memory_space<vmem>>, %arg3: memref<4x1xf32, #tpu.memory_space<vmem>>, %arg4: memref<1x4x256xf32, #tpu.memory_space<vmem>>) attributes {dimension_semantics = [#tpu.dimension_semantics<parallel>], iteration_bounds = array<i64: 2>, scalar_prefetch = 0 : i64, scratch_operands = 0 : i64, tpu.core_type = #tpu.core_type<tc>, window_params = [{transform_indices = @transform_0, window_bounds = array<i64: 1, 4, 256>}, {pipeline_mode = #tpu.pipeline_mode<synchronous>, transform_indices = @transform_1, window_bounds = array<i64: 4, 1>}, {pipeline_mode = #tpu.pipeline_mode<synchronous>, transform_indices = @transform_2, window_bounds = array<i64: 4, 1>}, {transform_indices = @transform_3, window_bounds = array<i64: 1, 4, 256>}]} {
    %c0 = arith.constant 0 : index
    %c0_0 = arith.constant 0 : index
    %c0_1 = arith.constant 0 : index
    %0 = vector.load %arg1[%c0, %c0_0, %c0_1] : memref<1x4x256xf32, #tpu.memory_space<vmem>>, vector<1x4x256xf32>
    %1 = vector.shape_cast %0 : vector<1x4x256xf32> to vector<4x256xf32>
    %cst = arith.constant dense<0.000000e+00> : vector<4xf32>
    %2 = vector.multi_reduction <add>, %1, %cst [1] : vector<4x256xf32> to vector<4xf32>
    %3 = vector.shape_cast %2 : vector<4xf32> to vector<4x1xf32>
    %cst_2 = arith.constant 3.906250e-03 : f32
    %4 = vector.broadcast %cst_2 : f32 to vector<4x1xf32>
    %5 = arith.mulf %3, %4 : vector<4x1xf32>
    %c0_3 = arith.constant 0 : index
    %c0_4 = arith.constant 0 : index
    %6 = vector.load %arg2[%c0_3, %c0_4] : memref<4x1xf32, #tpu.memory_space<vmem>>, vector<4x1xf32>
    %c0_5 = arith.constant 0 : index
    %c0_6 = arith.constant 0 : index
    %7 = vector.load %arg3[%c0_5, %c0_6] : memref<4x1xf32, #tpu.memory_space<vmem>>, vector<4x1xf32>
    %8 = arith.mulf %6, %5 : vector<4x1xf32>
    %cst_7 = arith.constant dense<0.000000e+00> : vector<1xf32>
    %9 = vector.multi_reduction <add>, %8, %cst_7 [0] : vector<4x1xf32> to vector<1xf32>
    %10 = vector.shape_cast %9 : vector<1xf32> to vector<1x1xf32>
    %cst_8 = arith.constant 0.000000e+00 : f32
    %11 = vector.broadcast %cst_8 : f32 to vector<1x1xf32>
    %12 = arith.subf %11, %10 : vector<1x1xf32>
    %13 = math.exp %12 : vector<1x1xf32>
    %cst_9 = arith.constant 1.000000e+00 : f32
    %14 = vector.broadcast %cst_9 : f32 to vector<1x1xf32>
    %15 = arith.addf %14, %13 : vector<1x1xf32>
    %cst_10 = arith.constant 1.000000e+00 : f32
    %16 = vector.broadcast %cst_10 : f32 to vector<1x1xf32>
    %17 = arith.divf %16, %15 : vector<1x1xf32>
    %18 = arith.mulf %10, %17 : vector<1x1xf32>
    %19 = vector.broadcast %18 : vector<1x1xf32> to vector<4x1xf32>
    %20 = arith.mulf %7, %19 : vector<4x1xf32>
    %cst_11 = arith.constant dense<0.000000e+00> : vector<4xf32>
    %21 = vector.multi_reduction <add>, %20, %cst_11 [1] : vector<4x1xf32> to vector<4xf32>
    %22 = vector.shape_cast %21 : vector<4xf32> to vector<4x1xf32>
    %cst_12 = arith.constant 0.000000e+00 : f32
    %23 = vector.broadcast %cst_12 : f32 to vector<4x1xf32>
    %24 = arith.subf %23, %22 : vector<4x1xf32>
    %25 = math.exp %24 : vector<4x1xf32>
    %cst_13 = arith.constant 1.000000e+00 : f32
    %26 = vector.broadcast %cst_13 : f32 to vector<4x1xf32>
    %27 = arith.addf %26, %25 : vector<4x1xf32>
    %cst_14 = arith.constant 1.000000e+00 : f32
    %28 = vector.broadcast %cst_14 : f32 to vector<4x1xf32>
    %29 = arith.divf %28, %27 : vector<4x1xf32>
    %30 = vector.broadcast %29 : vector<4x1xf32> to vector<4x256xf32>
    %31 = arith.mulf %1, %30 : vector<4x256xf32>
    %c0_15 = arith.constant 0 : index
    %c0_16 = arith.constant 0 : index
    %c0_17 = arith.constant 0 : index
    %32 = vector.load %arg4[%c0_15, %c0_16, %c0_17] : memref<1x4x256xf32, #tpu.memory_space<vmem>>, vector<1x4x256xf32>
    %33 = vector.shape_cast %32 : vector<1x4x256xf32> to vector<4x256xf32>
    %34 = vector.shape_cast %31 : vector<4x256xf32> to vector<1x4x256xf32>
    tpu.vector_store %arg4[%c0_15, %c0_16, %c0_17], %34 {strides = array<i32>} : memref<1x4x256xf32, #tpu.memory_space<vmem>>, vector<1x4x256xf32>,
    return
  }
  func.func @transform_0(%arg0: i32) -> (i32, i32, i32) {
    %c0_i32 = arith.constant 0 : i32
    %c0_i32_0 = arith.constant 0 : i32
    %c0_i32_1 = arith.constant 0 : i32
    return %arg0, %c0_i32, %c0_i32_0 : i32, i32, i32
  }
  func.func @transform_1(%arg0: i32) -> (i32, i32) {
    %c0_i32 = arith.constant 0 : i32
    %c0_i32_0 = arith.constant 0 : i32
    %c0_i32_1 = arith.constant 0 : i32
    return %c0_i32, %c0_i32_0 : i32, i32
  }
  func.func @transform_2(%arg0: i32) -> (i32, i32) {
    %c0_i32 = arith.constant 0 : i32
    %c0_i32_0 = arith.constant 0 : i32
    %c0_i32_1 = arith.constant 0 : i32
    return %c0_i32, %c0_i32_0 : i32, i32
  }
  func.func @transform_3(%arg0: i32) -> (i32, i32, i32) {
    %c0_i32 = arith.constant 0 : i32
    %c0_i32_0 = arith.constant 0 : i32
    %c0_i32_1 = arith.constant 0 : i32
    return %arg0, %c0_i32, %c0_i32_0 : i32, i32, i32
  }
}

</mosaic_0001>

<llo_original>
// kernel: se_forward.1
$region0: #{se_forward.1}
  #allocation0 [shape = 'u32[]', space=smem, size = 0x4, offset = 0x4, fixed_abs, tag = 'smem constant byte address 0x4 - core index']
  #allocation1 [shape = 'u32[72,128]{1,0:T(1,128)}', space=vmem, size = 0x9000, scoped, tag = 'internal scratch']
  %s0 = inlined_call_operand.vmem [shape: f32[2,4,256], index: 0, kind: input, shape index: {}]
  %s1 = inlined_call_operand.vmem [shape: f32[4,1], index: 1, kind: input, shape index: {}]
  %s2 = inlined_call_operand.vmem [shape: f32[4,1], index: 2, kind: input, shape index: {}]
  %s3 = inlined_call_operand.vmem [shape: f32[2,4,256], index: 3, kind: output, shape index: {}]
  %s4 = sld [smem:[#allocation0]]
  $region45: #{se_forward.1} parent=0
    _
  %s6 = ssub.s32 1, %s4
  %s7 = scalar_select 0, %s6, %s4
  loop: start=0, step=1, limit=4
  $region2: #{se_forward.1} parent=0 // loop_pre_header
    _
  $region3: #{se_forward.1} parent=0 // loop_header
    %s9 = sphi 0, %s13
    %p10 = scmp.ge.s32.totalorder %s9, 4
    %s19 = sphi 0, %s21
    %s22 = sphi 0, %s19
    %s23 = sphi 0, %s22
    %s39 = sphi 0, %s23
    %s43 = sphi 0, %s43
    %s45 = sphi 0, %s43
    %s46 = sphi 0, %s45
    %s60 = sphi 0, %s46
    %s64 = sphi 0, %s64
    %s66 = sphi 0, %s64
    %s67 = sphi 0, %s66
    %s81 = sphi 0, %s67
    %s87 = sphi 0, %s89
    %s90 = sphi 0, %s87
    %s91 = sphi 0, %s90
    %s107 = sphi 0, %s91
  $region4: #{se_forward.1} parent=0 // loop_header_branch
    %12 = sbr.rel (%p10) target = $region8
  $region5: #{se_forward.1} parent=0 // loop_body
    %s14 = ssub.s32 %s9, 1
    %s15 = ssub.s32 %s9, 2
    %s16 = sadd.s32 %s9, 1
    %s17 = ssub.s32 %s9, %s16
    %p18 = scmp.eq.s32.totalorder %s17, 0
    %s20 = sadd.s32 %s19, 1
    %s21 = scalar_select %p18, %s19, %s20
    %p24 = pneg %p18
    %p25 = scmp.eq.s32.totalorder %s9, 1
    %p26 = por %p24, %p25
    %p27 = scmp.ne.s32.totalorder %s19, %s22
    %p28 = scmp.eq.s32.totalorder %s9, 0
    %p29 = por %p27, %p28
    %p30 = scmp.ne.s32.totalorder %s19, %s22
    %p31 = scmp.eq.s32.totalorder %s14, 1
    %p32 = por %p30, %p31
    %p33 = scmp.ne.s32.totalorder %s22, %s23
    %p34 = scmp.eq.s32.totalorder %s14, 0
    %p35 = por %p33, %p34
    %p36 = scmp.ne.s32.totalorder %s22, %s23
    %p37 = scmp.eq.s32.totalorder %s15, 1
    %p38 = por %p36, %p37
    %p40 = scmp.ne.s32.totalorder %s23, %s39
    %p41 = scmp.eq.s32.totalorder %s15, 0
    %p42 = por %p40, %p41
    %s44 = sadd.s32 %s43, 1
    %p47 = scmp.eq.s32.totalorder %s9, 1
    %p48 = scmp.ne.s32.totalorder %s43, %s45
    %p49 = scmp.eq.s32.totalorder %s9, 0
    %p50 = por %p48, %p49
    %p51 = scmp.ne.s32.totalorder %s43, %s45
    %p52 = scmp.eq.s32.totalorder %s14, 1
    %p53 = por %p51, %p52
    %p54 = scmp.ne.s32.totalorder %s45, %s46
    %p55 = scmp.eq.s32.totalorder %s14, 0
    %p56 = por %p54, %p55
    %p57 = scmp.ne.s32.totalorder %s45, %s46
    %p58 = scmp.eq.s32.totalorder %s15, 1
    %p59 = por %p57, %p58
    %p61 = scmp.ne.s32.totalorder %s46, %s60
    %p62 = scmp.eq.s32.totalorder %s15, 0
    %p63 = por %p61, %p62
    %s65 = sadd.s32 %s64, 1
    %p68 = scmp.eq.s32.totalorder %s9, 1
    %p69 = scmp.ne.s32.totalorder %s64, %s66
    %p70 = scmp.eq.s32.totalorder %s9, 0
    %p71 = por %p69, %p70
    %p72 = scmp.ne.s32.totalorder %s64, %s66
    %p73 = scmp.eq.s32.totalorder %s14, 1
    %p74 = por %p72, %p73
    %p75 = scmp.ne.s32.totalorder %s66, %s67
    %p76 = scmp.eq.s32.totalorder %s14, 0
    %p77 = por %p75, %p76
    %p78 = scmp.ne.s32.totalorder %s66, %s67
    %p79 = scmp.eq.s32.totalorder %s15, 1
    %p80 = por %p78, %p79
    %p82 = scmp.ne.s32.totalorder %s67, %s81
    %p83 = scmp.eq.s32.totalorder %s15, 0
    %p84 = por %p82, %p83
    %s85 = ssub.s32 %s9, %s16
    %p86 = scmp.eq.s32.totalorder %s85, 0
    %s88 = sadd.s32 %s87, 1
    %s89 = scalar_select %p86, %s87, %s88
    %p92 = pneg %p86
    %p93 = scmp.eq.s32.totalorder %s9, 1
    %p94 = por %p92, %p93
    %p95 = scmp.ne.s32.totalorder %s87, %s90
    %p96 = scmp.eq.s32.totalorder %s9, 0
    %p97 = por %p95, %p96
    %p98 = scmp.ne.s32.totalorder %s87, %s90
    %p99 = scmp.eq.s32.totalorder %s14, 1
    %p100 = por %p98, %p99
    %p101 = scmp.ne.s32.totalorder %s90, %s91
    %p102 = scmp.eq.s32.totalorder %s14, 0
    %p103 = por %p101, %p102
    %p104 = scmp.ne.s32.totalorder %s90, %s91
    %p105 = scmp.eq.s32.totalorder %s15, 1
    %p106 = por %p104, %p105
    %p108 = scmp.ne.s32.totalorder %s91, %s107
    %p109 = scmp.eq.s32.totalorder %s15, 0
    %p110 = por %p108, %p109
    %p111 = scmp.le.s32.totalorder 1, %s9
    %p112 = scmp.lt.s32.totalorder %s9, 3
    %p113 = pnand %p111, %p112
    %p114 = pneg %p113
    // Predicated region
    $region9: #{se_forward.1} parent=5 // pred_check
      _
    $region10: #{se_forward.1} parent=5 // pred_check_branch
      %116 = sbr.rel (%p113) target = $region12
    $region11: #{se_forward.1} parent=5 // pred_region
      %s117 = ssub.s32 %s9, 1
      // Predicated region
      $region13: #{se_forward.1} parent=11 // pred_check
        %p118 = pneg %p56
      $region14: #{se_forward.1} parent=11 // pred_check_branch
        %120 = sbr.rel (%p118) target = $region16
      $region15: #{se_forward.1} parent=11 // pred_region
        _
      $region16: #{se_forward.1} parent=11 // pred_fallthru
        _
      // Predicated region
      $region17: #{se_forward.1} parent=11 // pred_check
        %p121 = pneg %p77
      $region18: #{se_forward.1} parent=11 // pred_check_branch
        %123 = sbr.rel (%p121) target = $region20
      $region19: #{se_forward.1} parent=11 // pred_region
        _
      $region20: #{se_forward.1} parent=11 // pred_fallthru
        _
    $region12: #{se_forward.1} parent=5 // pred_fallthru
      _
    %p124 = scmp.lt.s32.totalorder %s9, 2
    // Predicated region
    $region21: #{se_forward.1} parent=5 // pred_check
      %p125 = pneg %p124
    $region22: #{se_forward.1} parent=5 // pred_check_branch
      %127 = sbr.rel (%p125) target = $region24
    $region23: #{se_forward.1} parent=5 // pred_region
      // Predicated region
      $region25: #{se_forward.1} parent=23 // pred_check
        %p128 = pneg %p29
      $region26: #{se_forward.1} parent=23 // pred_check_branch
        %130 = sbr.rel (%p128) target = $region28
      $region27: #{se_forward.1} parent=23 // pred_region
        %p131 = scmp.lt.s32.totalorder %s9, 1
        %s132 = scalar_select %p131, %s9, 1
        %s133 = smul.addr %s132, 2
        %s134 = smul.addr %s133, 4
        %s135 = scalar_lea.vmem %s0, %s134
      $region28: #{se_forward.1} parent=23 // pred_fallthru
        _
    $region24: #{se_forward.1} parent=5 // pred_fallthru
      _
    %p136 = scmp.le.s32.totalorder 1, %s9
    %p137 = scmp.lt.s32.totalorder %s9, 3
    %p138 = pnand %p136, %p137
    %p139 = pneg %p138
    // Predicated region
    $region29: #{se_forward.1} parent=5 // pred_check
      _
    $region30: #{se_forward.1} parent=5 // pred_check_branch
      %141 = sbr.rel (%p138) target = $region32
    $region31: #{se_forward.1} parent=5 // pred_region
      %s142 = ssub.s32 %s9, 1
      %p143 = scmp.lt.s32.totalorder %s14, 1
      %s144 = scalar_select %p143, %s14, 1
      %s145 = smul.addr %s144, 2
      %s146 = smul.addr %s145, 4
      %s147 = scalar_lea.vmem %s0, %s146
      %p148 = pneg %p35
      %p149 = pneg %p32
      %p150 = pneg %p56
      %p151 = pneg %p53
      %p152 = pneg %p77
      %p153 = pneg %p74
      %p154 = pneg %p103
      %p155 = pneg %p100
      %p156 = scmp.lt.s32.totalorder %s14, 1
      %s157 = scalar_select %p156, %s14, 1
      %s158 = smul.addr %s157, 2
      %s159 = smul.addr %s158, 4
      %s160 = scalar_lea.vmem %s3, %s159
      %p161 = scmp.lt.s32.totalorder %s14, 1
      %s162 = scalar_select %p161, %s14, 1
      %s163 = smul.addr %s162, 2
      %s164 = smul.addr %s163, 4
      %s165 = scalar_lea.vmem %s0, %s164
      %p166 = scmp.lt.s32.totalorder %s14, 1
      %s167 = scalar_select %p166, %s14, 1
      %s168 = smul.addr %s167, 2
      %s169 = smul.addr %s168, 4
      %s170 = scalar_lea.vmem %s3, %s169
      %v171 = vld [vmem:[%s165] sm:$0xff]
      %173 = vst [vmem:[#allocation1] ss:$2 sm:$0xff] %v171
      %v174 = vld.sshfl [vmem:[#allocation1] sm:$0xff pattern:$0x75316420]
      %v175 = vld.sshfl [vmem:[#allocation1 + $0x8] sm:$0xff pattern:$0x75316420]
      %vm178 = vcmask 1043456
      %v179 = vsel %vm178, %v174, 0.0
      %v180 = vsel %vm178, %v175, 0.0
      %v181 = vadd.f32 %v179, %v180
      %182 = vadd.xlane.f32.xlu0 %v181
      %v183 = vpop.xlane.xlu0 %182
      %v184 = vmul.f32 %v183, 0.00390625
      %v185 = vld [vmem:[%s1] sm:$0xf]
      %v186 = vld [vmem:[%s2] sm:$0xf]
      %v187 = vmul.f32 %v185, %v184
      %vm188 = vcmask 3072
      %v189 = vsel %vm188, %v187, 0.0
      %v190 = vrot.slane %v189, 4
      %v191 = vadd.f32 %v189, %v190
      %v192 = vrot.slane %v191, 2
      %v193 = vadd.f32 %v191, %v192
      %v194 = vrot.slane %v193, 1
      %v195 = vadd.f32 %v193, %v194
      %v196 = vsub.f32 0.0, %v195
      %v197 = vmul.f32 %v196, 1.442695
      %v198 = vpow.pop %v197
      %v199 = vadd.f32 %v198, 1.0
      %v200 = vrcp.pop %v199
      %v201 = vmul.f32 %v199, %v200
      %v202 = vsub.f32 1.0, %v201
      %v203 = vmul.f32 %v200, %v202
      %v204 = vadd.f32 %v200, %v203
      %vm205 = vweird.f32 %v199
      %vm206 = vweird.f32 %v200
      %vm207 = vmor %vm205, %vm206
      %v208 = vsel %vm207, %v200, %v204
      %v209 = vand.u32 2147483647, %v199
      %vm210 = vcmp.eq.f32.partialorder %v209, 8.507059e+37
      %v211 = vand.u32 %v199, 2147483648
      %v212 = vor.u32 1.1754944e-38, %v211
      %v213 = vsel %vm210, %v212, %v208
      %v214 = vmul.f32 1.0, %v213
      %v215 = vmul.f32 %v195, %v214
      %v216 = vmul.f32 %v186, %v215
      %v217 = vadd.f32 %v216, 0.0
      %v218 = vsub.f32 0.0, %v217
      %v219 = vmul.f32 %v218, 1.442695
      %v220 = vpow.pop %v219
      %v221 = vadd.f32 %v220, 1.0
      %v222 = vrcp.pop %v221
      %v223 = vmul.f32 %v221, %v222
      %v224 = vsub.f32 1.0, %v223
      %v225 = vmul.f32 %v222, %v224
      %v226 = vadd.f32 %v222, %v225
      %vm227 = vweird.f32 %v221
      %vm228 = vweird.f32 %v222
      %vm229 = vmor %vm227, %vm228
      %v230 = vsel %vm229, %v222, %v226
      %v231 = vand.u32 2147483647, %v221
      %vm232 = vcmp.eq.f32.partialorder %v231, 8.507059e+37
      %v233 = vand.u32 %v221, 2147483648
      %v234 = vor.u32 1.1754944e-38, %v233
      %v235 = vsel %vm232, %v234, %v230
      %v236 = vmul.f32 1.0, %v235
      %238 = vset.pattern.permute.xlu0 0
      %239 = vperm.xlu0 %238, %v236
      %v240 = vpop.permute.xlu0 %239
      %v242 = vunpack.c.l.s4 839922192
      %v243 = vunpack.c.0.s8 %v242
      %v244 = vperm.slane %v240, %v243
      %v246 = vmul.f32 %v171, %v244
      %247 = vst [vmem:[%s170] sm:$0xff] %v246
      %p248 = scmp.lt.s32.totalorder %s14, 1
      %s249 = scalar_select %p248, %s14, 1
      %s250 = smul.addr %s249, 2
      %s251 = smul.addr %s250, 4
      %s252 = scalar_lea.vmem %s3, %s251
      // Predicated region
      $region33: #{se_forward.1} parent=31 // pred_check
        %p253 = pneg %p100
      $region34: #{se_forward.1} parent=31 // pred_check_branch
        %255 = sbr.rel (%p253) target = $region36
      $region35: #{se_forward.1} parent=31 // pred_region
        _
      $region36: #{se_forward.1} parent=31 // pred_fallthru
        _
    $region32: #{se_forward.1} parent=5 // pred_fallthru
      _
    %p256 = scmp.le.s32.totalorder 2, %s9
    // Predicated region
    $region37: #{se_forward.1} parent=5 // pred_check
      %p257 = pneg %p256
    $region38: #{se_forward.1} parent=5 // pred_check_branch
      %259 = sbr.rel (%p257) target = $region40
    $region39: #{se_forward.1} parent=5 // pred_region
      %s260 = ssub.s32 %s9, 2
      // Predicated region
      $region41: #{se_forward.1} parent=39 // pred_check
        %p261 = pneg %p106
      $region42: #{se_forward.1} parent=39 // pred_check_branch
        %263 = sbr.rel (%p261) target = $region44
      $region43: #{se_forward.1} parent=39 // pred_region
        %p264 = scmp.lt.s32.totalorder %s15, 1
        %s265 = scalar_select %p264, %s15, 1
        %s266 = smul.addr %s265, 2
        %s267 = smul.addr %s266, 4
        %s268 = scalar_lea.vmem %s3, %s267
      $region44: #{se_forward.1} parent=39 // pred_fallthru
        _
    $region40: #{se_forward.1} parent=5 // pred_fallthru
      _
  $region6: #{se_forward.1} parent=0 // loop_footer
    %s13 = sadd.s32 1, %s9
  $region7: #{se_forward.1} parent=0 // loop_footer_branch
    %8 = sbr.rel target = $region3
  $region8: #{se_forward.1} parent=0 // loop_exit
    _

</llo_original>
